<compile_context>
chip_gen: v7x
topology: tpu7x:2x2x1
jax: 0.10.0
libtpu: 0.0.40
codegen_flags: <defaults>
</compile_context>

<pallas_src>
import functools
import math

import jax
import jax.numpy as jnp
from jax.experimental import pallas as pl
from jax.experimental.pallas import tpu as pltpu


def _make_decoder_kernel(need_tail_mask, sd, hw_de):
    """Kernel factory. `sd`/`hw_de` are static ints; `need_tail_mask` static bool."""

    def kernel(xd_ref, xe_ref, wd_ref, we_ref, exp_ref, b_ref, o_ref):
        # xd_ref: (1, Cin,  Sd)   low-res `de` spatial tile (flattened H*W slice)
        # xe_ref: (1, Cout, S2)   full-res `en` spatial tile (S2 = 4*Sd)
        # wd/we : (Cout, Cin) / (Cout, Cout)   BN-folded split conv weights (resident)
        # exp   : (Sd, S2) f32 0/1 expansion matrix = fused nearest-2x upsample (resident)
        # b     : (Cout, 1) f32 folded BN bias (resident)
        xd = xd_ref[0]                                                   # (Cin, Sd)
        # de-branch 1x1 conv at LOW resolution (4x fewer MACs than post-upsample).
        yd = jnp.dot(wd_ref[...], xd, preferred_element_type=jnp.float32)  # (Cout, Sd)
        if need_tail_mask:
            # Last spatial tile is partial: zero the padded columns so garbage (possibly
            # NaN) cannot propagate into valid outputs via 0*NaN in the expansion matmul.
            start = pl.program_id(1) * sd
            lane = jax.lax.broadcasted_iota(jnp.int32, yd.shape, 1)
            yd = jnp.where(lane < (hw_de - start), yd, 0.0)
        # Fused nearest-2x upsample: exact duplication via a 0/1 matmul (MXU; the MXU is
        # massively underutilized on this mem-bound op, so the extra flops are free).
        yd_up = jnp.dot(yd, exp_ref[...], preferred_element_type=jnp.float32)  # (Cout, S2)
        # en-branch 1x1 conv at full resolution.
        ye = jnp.dot(we_ref[...], xe_ref[0], preferred_element_type=jnp.float32)
        y = yd_up + ye + b_ref[...]                      # f32 bias add (lane broadcast)
        o_ref[0] = jnp.maximum(y, 0.0).astype(o_ref.dtype)

    return kernel


def _nearest2x_expansion(th, w, dtype=jnp.float32):
    """0/1 matrix E (th*w, 4*th*w): flat low-res tile -> flat nearest-2x-upsampled tile."""
    sd = th * w
    r2 = jnp.arange(2 * th)[:, None]                 # output row within the tile
    c2 = jnp.arange(2 * w)[None, :]                  # output col within the tile
    src = ((r2 // 2) * w + (c2 // 2)).reshape(1, -1)  # (1, S2) low-res source index
    return (jnp.arange(sd)[:, None] == src).astype(dtype)


def _choose_de_row_tile(H, W, bytes_per_de_row, *, max_sd=512, min_steps=8, batch=1):
    """Rows of low-res `de` per spatial tile.

    Sd = th*W must be a multiple of 128 (lane tiling) unless th == H (full-dim block).
    `max_sd` bounds the (Sd, 4*Sd) f32 expansion matrix to a few MiB of VMEM (safe for
    v7x's 64 MiB physical VMEM even when double-buffered).
    """
    HW = H * W
    if HW <= max(max_sd, 128):
        return H                                      # whole image per block
    unit = 128 // math.gcd(W, 128)                    # min rows with (rows*W) % 128 == 0
    if unit >= H:
        # TODO(synk): very wide / odd-width rows force a large expansion matrix; an
        # in-kernel lane gather (jnp.take) would avoid it but is not used for safety.
        return H
    th = (max_sd // W) // unit * unit
    th = max(unit, min(th, (H // unit) * unit))
    # Prefer >= min_steps total grid steps (v7x has 2 TensorCores on the "parallel"
    # axes), but never shrink a tile below ~1 MiB/step (single-TC v5e/v6e: extra steps
    # only add the ~0.35us/step overhead).
    while batch * pl.cdiv(H, th) < min_steps and th > unit:
        smaller = max(unit, (th // 2) // unit * unit)
        if smaller == th or smaller * bytes_per_de_row < (1 << 20):
            break
        th = smaller
    return th


@functools.partial(jax.jit, static_argnames=("eps", "max_sd", "min_steps"))
def decoder_block_pallas(de, en, w, gamma, beta, running_mean, running_var,
                         *, eps=1e-5, max_sd=512, min_steps=8):
    """Fused Decoder_Block forward (inference / eval-mode BatchNorm), NCHW in/out.

    de: (B, Cin, H, W)           decoder feature
    en: (B, Cout, 2H, 2W)        encoder skip feature, Cout == Cin // 2
    w : (Cout, Cin+Cout, 1, 1)   1x1 conv weight (bias=False)
    gamma/beta/running_mean/running_var: (Cout,) BatchNorm2d parameters.
    Pass bf16 `de`/`en` to get the bf16-MXU path with no wrapper-side casts.
    """
    B, Cin, H, W = de.shape
    Be, Cout, H2, W2 = en.shape
    assert Be == B and H2 == 2 * H and W2 == 2 * W
    assert Cout == Cin // 2, "decoder block expects out_channel == in_channel // 2"
    assert w.shape == (Cout, Cin + Cout, 1, 1)

    if en.dtype != de.dtype:
        en = en.astype(de.dtype)
    cdtype = de.dtype                 # bf16 inputs -> bf16 MXU operands (f32 accum kept)
    out_dtype = de.dtype
    isz = jnp.dtype(cdtype).itemsize
    osz = jnp.dtype(out_dtype).itemsize

    # ---- NCHW kept; only free contiguous reshapes. Channels on sublanes, flattened
    #      spatial on the lane axis (lane-dense stores for any channel count). ----
    de3 = de.reshape(B, Cin, H * W)
    en3 = en.reshape(B, Cout, H2 * W2)

    # ---- fold eval-mode BatchNorm into the split 1x1-conv weights (once, f32) ----
    # TODO(synk): training-mode BatchNorm (batch statistics + running-stat updates) is
    # not implemented; this is the standard inference-mode forward.
    w2d = w.reshape(Cout, Cin + Cout).astype(jnp.float32)
    scale = gamma.astype(jnp.float32) / jnp.sqrt(running_var.astype(jnp.float32) + eps)
    shift = beta.astype(jnp.float32) - running_mean.astype(jnp.float32) * scale
    w_de = (w2d[:, :Cin] * scale[:, None]).astype(cdtype)        # (Cout, Cin)
    w_en = (w2d[:, Cin:] * scale[:, None]).astype(cdtype)        # (Cout, Cout)
    bias = shift.reshape(Cout, 1)                                # (Cout, 1) f32

    # ---- spatial tiling over de rows; fused nearest-2x upsample via expansion matmul ----
    bytes_per_de_row = W * Cin * isz + 4 * W * Cout * (isz + osz)
    th = _choose_de_row_tile(H, W, bytes_per_de_row,
                             max_sd=max_sd, min_steps=min_steps, batch=B)
    sd, s2 = th * W, 4 * th * W
    n_sp = pl.cdiv(H, th)
    need_tail_mask = (H % th) != 0
    exp = _nearest2x_expansion(th, W)                            # (sd, s2) f32, resident

    # Explicit VMEM budget (double-buffered activation blocks + expansion matrix).
    # NOTE: the resident weight/bias/expansion blocks could be single-buffered with
    # pipeline_mode=pl.Buffered(1); omitted here to stay API-version safe.
    blk_bytes = Cin * sd * isz + Cout * s2 * isz + Cout * s2 * osz
    vmem_limit = int(min(max(2 * (blk_bytes + sd * s2 * 4) + (2 << 20), 32 << 20),
                         48 << 20))

    cost = pl.CostEstimate(
        flops=2 * B * H2 * W2 * (Cin + Cout) * Cout,
        transcendentals=0,
        bytes_accessed=(de3.size * isz + en3.size * isz + B * Cout * H2 * W2 * osz
                        + (w_de.size + w_en.size) * isz + bias.size * 4),
    )

    out = pl.pallas_call(
        _make_decoder_kernel(need_tail_mask, sd, H * W),
        out_shape=jax.ShapeDtypeStruct((B, Cout, H2 * W2), out_dtype),
        grid_spec=pltpu.PrefetchScalarGridSpec(
            num_scalar_prefetch=0,
            grid=(B, n_sp),
            in_specs=[
                pl.BlockSpec((1, Cin, sd), lambda b, i: (b, 0, i)),    # low-res de tile
                pl.BlockSpec((1, Cout, s2), lambda b, i: (b, 0, i)),   # full-res en tile
                pl.BlockSpec((Cout, Cin), lambda b, i: (0, 0)),        # w_de (resident)
                pl.BlockSpec((Cout, Cout), lambda b, i: (0, 0)),       # w_en (resident)
                pl.BlockSpec((sd, s2), lambda b, i: (0, 0)),           # upsample matrix
                pl.BlockSpec((Cout, 1), lambda b, i: (0, 0)),          # folded BN bias
            ],
            out_specs=pl.BlockSpec((1, Cout, s2), lambda b, i: (b, 0, i)),
        ),
        compiler_params=pltpu.CompilerParams(
            dimension_semantics=("parallel", "parallel"),
            vmem_limit_bytes=vmem_limit,
        ),
        cost_estimate=cost,
    )(de3, en3, w_de, w_en, exp, bias)

    return out.reshape(B, Cout, H2, W2)                              # free reshape, NCHW


def decoder_block_reference(de, en, w, gamma, beta, running_mean, running_var, eps=1e-5):
    """Pure-JAX mirror of the PyTorch forward (eval-mode BN), in NCHW."""
    de_up = jnp.repeat(jnp.repeat(de, 2, axis=2), 2, axis=3)
    x = jnp.concatenate([de_up, en], axis=1)
    y = jnp.einsum("bchw,oc->bohw", x, w.reshape(w.shape[0], -1))
    inv = 1.0 / jnp.sqrt(running_var + eps)
    y = (y - running_mean[None, :, None, None]) * inv[None, :, None, None]
    y = y * gamma[None, :, None, None] + beta[None, :, None, None]
    return jnp.maximum(y, 0.0)


if __name__ == "__main__":
    key = jax.random.PRNGKey(0)
    B = 2
    in_channel = 8                    # Decoder_Block requires out_channel == in_channel // 2
    out_channel = in_channel // 2
    H = W = 8                         # `de` spatial; `en` / output spatial is 16 x 16

    kde, ken, kw, kg, kb, km, kv = jax.random.split(key, 7)
    de = jax.random.normal(kde, (B, in_channel, H, W), dtype=jnp.float32)
    en = jax.random.normal(ken, (B, out_channel, 2 * H, 2 * W), dtype=jnp.float32)
    w = jax.random.normal(kw, (out_channel, in_channel + out_channel, 1, 1),
                          dtype=jnp.float32) * 0.1
    gamma = 1.0 + 0.1 * jax.random.normal(kg, (out_channel,), dtype=jnp.float32)
    beta = 0.1 * jax.random.normal(kb, (out_channel,), dtype=jnp.float32)
    running_mean = 0.1 * jax.random.normal(km, (out_channel,), dtype=jnp.float32)
    running_var = jax.random.uniform(kv, (out_channel,), dtype=jnp.float32,
                                     minval=0.5, maxval=1.5)

    y_ref = decoder_block_reference(de, en, w, gamma, beta, running_mean, running_var)

    # f32 path (tight numerical check).
    y = decoder_block_pallas(de, en, w, gamma, beta, running_mean, running_var)
    y = jax.block_until_ready(y)
    assert y.shape == (B, out_channel, 2 * H, 2 * W)
    assert jnp.allclose(y, y_ref, atol=1e-4, rtol=1e-4), "f32 mismatch vs reference"

    # bf16 activations "from the producer" (halves HBM traffic; f32 accumulation kept).
    y_bf16 = decoder_block_pallas(de.astype(jnp.bfloat16), en.astype(jnp.bfloat16),
                                  w, gamma, beta, running_mean, running_var)
    y_bf16 = jax.block_until_ready(y_bf16)
    assert jnp.allclose(y_bf16.astype(jnp.float32), y_ref, atol=1e-1, rtol=1e-1), \
        "bf16 path diverged from reference"

    print("KERNEL_OK")
</pallas_src>

<mosaic_0001>
module attributes {stable_mosaic.version = 11 : i64} {
  func.func @kernel(%arg0: i32, %arg1: i32, %arg2: memref<1x8x64xf32, #tpu.memory_space<vmem>>, %arg3: memref<1x4x256xf32, #tpu.memory_space<vmem>>, %arg4: memref<4x8xf32, #tpu.memory_space<vmem>>, %arg5: memref<4x4xf32, #tpu.memory_space<vmem>>, %arg6: memref<64x256xf32, #tpu.memory_space<vmem>>, %arg7: memref<4x1xf32, #tpu.memory_space<vmem>>, %arg8: memref<1x4x256xf32, #tpu.memory_space<vmem>>) attributes {dimension_semantics = [#tpu.dimension_semantics<parallel>, #tpu.dimension_semantics<parallel>], iteration_bounds = array<i64: 2, 1>, scalar_prefetch = 0 : i64, scratch_operands = 0 : i64, tpu.core_type = #tpu.core_type<tc>, window_params = [{transform_indices = @transform_0, window_bounds = array<i64: 1, 8, 64>}, {transform_indices = @transform_1, window_bounds = array<i64: 1, 4, 256>}, {pipeline_mode = #tpu.pipeline_mode<synchronous>, transform_indices = @transform_2, window_bounds = array<i64: 4, 8>}, {pipeline_mode = #tpu.pipeline_mode<synchronous>, transform_indices = @transform_3, window_bounds = array<i64: 4, 4>}, {pipeline_mode = #tpu.pipeline_mode<synchronous>, transform_indices = @transform_4, window_bounds = array<i64: 64, 256>}, {pipeline_mode = #tpu.pipeline_mode<synchronous>, transform_indices = @transform_5, window_bounds = array<i64: 4, 1>}, {transform_indices = @transform_6, window_bounds = array<i64: 1, 4, 256>}]} {
    %c0 = arith.constant 0 : index
    %c0_0 = arith.constant 0 : index
    %c0_1 = arith.constant 0 : index
    %0 = vector.load %arg2[%c0, %c0_0, %c0_1] : memref<1x8x64xf32, #tpu.memory_space<vmem>>, vector<1x8x64xf32>
    %1 = vector.shape_cast %0 : vector<1x8x64xf32> to vector<8x64xf32>
    %c0_2 = arith.constant 0 : index
    %c0_3 = arith.constant 0 : index
    %2 = vector.load %arg4[%c0_2, %c0_3] : memref<4x8xf32, #tpu.memory_space<vmem>>, vector<4x8xf32>
    %cst = arith.constant dense<0.000000e+00> : vector<4x64xf32>
    %3 = tpu.matmul %2, %1, %cst {dimension_numbers = #tpu.dot_dimension_numbers<[1], [0], [0], [1], [0, 0, 1, 1], [], []>} : vector<4x8xf32>, vector<8x64xf32>, vector<4x64xf32> -> vector<4x64xf32>
    %c0_4 = arith.constant 0 : index
    %c0_5 = arith.constant 0 : index
    %4 = vector.load %arg6[%c0_4, %c0_5] : memref<64x256xf32, #tpu.memory_space<vmem>>, vector<64x256xf32>
    %cst_6 = arith.constant dense<0.000000e+00> : vector<4x256xf32>
    %5 = tpu.matmul %3, %4, %cst_6 {dimension_numbers = #tpu.dot_dimension_numbers<[1], [0], [0], [1], [0, 0, 1, 1], [], []>} : vector<4x64xf32>, vector<64x256xf32>, vector<4x256xf32> -> vector<4x256xf32>
    %c0_7 = arith.constant 0 : index
    %c0_8 = arith.constant 0 : index
    %6 = vector.load %arg5[%c0_7, %c0_8] : memref<4x4xf32, #tpu.memory_space<vmem>>, vector<4x4xf32>
    %c0_9 = arith.constant 0 : index
    %c0_10 = arith.constant 0 : index
    %c0_11 = arith.constant 0 : index
    %7 = vector.load %arg3[%c0_9, %c0_10, %c0_11] : memref<1x4x256xf32, #tpu.memory_space<vmem>>, vector<1x4x256xf32>
    %8 = vector.shape_cast %7 : vector<1x4x256xf32> to vector<4x256xf32>
    %cst_12 = arith.constant dense<0.000000e+00> : vector<4x256xf32>
    %9 = tpu.matmul %6, %8, %cst_12 {dimension_numbers = #tpu.dot_dimension_numbers<[1], [0], [0], [1], [0, 0, 1, 1], [], []>} : vector<4x4xf32>, vector<4x256xf32>, vector<4x256xf32> -> vector<4x256xf32>
    %10 = arith.addf %5, %9 : vector<4x256xf32>
    %c0_13 = arith.constant 0 : index
    %c0_14 = arith.constant 0 : index
    %11 = vector.load %arg7[%c0_13, %c0_14] : memref<4x1xf32, #tpu.memory_space<vmem>>, vector<4x1xf32>
    %12 = vector.broadcast %11 : vector<4x1xf32> to vector<4x256xf32>
    %13 = arith.addf %10, %12 : vector<4x256xf32>
    %cst_15 = arith.constant 0.000000e+00 : f32
    %14 = vector.broadcast %cst_15 : f32 to vector<4x256xf32>
    %15 = arith.maximumf %13, %14 : vector<4x256xf32>
    %c0_16 = arith.constant 0 : index
    %c0_17 = arith.constant 0 : index
    %c0_18 = arith.constant 0 : index
    %16 = vector.load %arg8[%c0_16, %c0_17, %c0_18] : memref<1x4x256xf32, #tpu.memory_space<vmem>>, vector<1x4x256xf32>
    %17 = vector.shape_cast %16 : vector<1x4x256xf32> to vector<4x256xf32>
    %18 = vector.shape_cast %15 : vector<4x256xf32> to vector<1x4x256xf32>
    tpu.vector_store %arg8[%c0_16, %c0_17, %c0_18], %18 {strides = array<i32>} : memref<1x4x256xf32, #tpu.memory_space<vmem>>, vector<1x4x256xf32>,
    return
  }
  func.func @transform_0(%arg0: i32, %arg1: i32) -> (i32, i32, i32) {
    %c0_i32 = arith.constant 0 : i32
    %c0_i32_0 = arith.constant 0 : i32
    return %arg0, %c0_i32, %arg1 : i32, i32, i32
  }
  func.func @transform_1(%arg0: i32, %arg1: i32) -> (i32, i32, i32) {
    %c0_i32 = arith.constant 0 : i32
    %c0_i32_0 = arith.constant 0 : i32
    return %arg0, %c0_i32, %arg1 : i32, i32, i32
  }
  func.func @transform_2(%arg0: i32, %arg1: i32) -> (i32, i32) {
    %c0_i32 = arith.constant 0 : i32
    %c0_i32_0 = arith.constant 0 : i32
    %c0_i32_1 = arith.constant 0 : i32
    return %c0_i32, %c0_i32_0 : i32, i32
  }
  func.func @transform_3(%arg0: i32, %arg1: i32) -> (i32, i32) {
    %c0_i32 = arith.constant 0 : i32
    %c0_i32_0 = arith.constant 0 : i32
    %c0_i32_1 = arith.constant 0 : i32
    return %c0_i32, %c0_i32_0 : i32, i32
  }
  func.func @transform_4(%arg0: i32, %arg1: i32) -> (i32, i32) {
    %c0_i32 = arith.constant 0 : i32
    %c0_i32_0 = arith.constant 0 : i32
    %c0_i32_1 = arith.constant 0 : i32
    return %c0_i32, %c0_i32_0 : i32, i32
  }
  func.func @transform_5(%arg0: i32, %arg1: i32) -> (i32, i32) {
    %c0_i32 = arith.constant 0 : i32
    %c0_i32_0 = arith.constant 0 : i32
    %c0_i32_1 = arith.constant 0 : i32
    return %c0_i32, %c0_i32_0 : i32, i32
  }
  func.func @transform_6(%arg0: i32, %arg1: i32) -> (i32, i32, i32) {
    %c0_i32 = arith.constant 0 : i32
    %c0_i32_0 = arith.constant 0 : i32
    return %arg0, %c0_i32, %arg1 : i32, i32, i32
  }
}

</mosaic_0001>

<llo_original>
// kernel: decoder_block_pallas.1
$region0: #{decoder_block_pallas.1}
  #allocation0 [shape = 'u32[]', space=smem, size = 0x4, offset = 0x4, fixed_abs, tag = 'smem constant byte address 0x4 - core index']
  #allocation1 [shape = 'u32[144,128]{1,0:T(1,128)}', space=vmem, size = 0x12000, scoped, tag = 'internal scratch']
  %s0 = inlined_call_operand.vmem [shape: f32[2,8,64], index: 0, kind: input, shape index: {}]
  %s1 = inlined_call_operand.vmem [shape: f32[2,4,256], index: 1, kind: input, shape index: {}]
  %s2 = inlined_call_operand.vmem [shape: f32[4,8], index: 2, kind: input, shape index: {}]
  %s3 = inlined_call_operand.vmem [shape: f32[4,4], index: 3, kind: input, shape index: {}]
  %s4 = inlined_call_operand.vmem [shape: f32[64,256], index: 4, kind: input, shape index: {}]
  %s5 = inlined_call_operand.vmem [shape: f32[4,1], index: 5, kind: input, shape index: {}]
  %s6 = inlined_call_operand.vmem [shape: f32[2,4,256], index: 6, kind: output, shape index: {}]
  %s7 = sld [smem:[#allocation0]]
  $region57: #{decoder_block_pallas.1} parent=0
    _
  %s9 = ssub.s32 1, %s7
  %s10 = scalar_select 0, %s9, %s7
  loop: start=0, step=1, limit=4
  $region2: #{decoder_block_pallas.1} parent=0 // loop_pre_header
    _
  $region3: #{decoder_block_pallas.1} parent=0 // loop_header
    %s12 = sphi 0, %s16
    %p13 = scmp.ge.s32.totalorder %s12, 4
    %s19 = sphi 0, %s31
    %s20 = sphi 0, %s27
    %s21 = sphi 0, %s19
    %s22 = sphi 0, %s20
    %s23 = sphi 0, %s21
    %s24 = sphi 0, %s22
    %s36 = sphi 0, %s38
    %s39 = sphi 0, %s36
    %s40 = sphi 0, %s39
    %s56 = sphi 0, %s40
    %s64 = sphi 0, %s66
    %s67 = sphi 0, %s64
    %s68 = sphi 0, %s67
    %s84 = sphi 0, %s68
    %s88 = sphi 0, %s88
    %s90 = sphi 0, %s88
    %s91 = sphi 0, %s90
    %s105 = sphi 0, %s91
    %s109 = sphi 0, %s109
    %s111 = sphi 0, %s109
    %s112 = sphi 0, %s111
    %s126 = sphi 0, %s112
    %s130 = sphi 0, %s130
    %s132 = sphi 0, %s130
    %s133 = sphi 0, %s132
    %s147 = sphi 0, %s133
    %s151 = sphi 0, %s151
    %s153 = sphi 0, %s151
    %s154 = sphi 0, %s153
    %s168 = sphi 0, %s154
    %s176 = sphi 0, %s178
    %s179 = sphi 0, %s176
    %s180 = sphi 0, %s179
    %s196 = sphi 0, %s180
  $region4: #{decoder_block_pallas.1} parent=0 // loop_header_branch
    %15 = sbr.rel (%p13) target = $region8
  $region5: #{decoder_block_pallas.1} parent=0 // loop_body
    %s17 = ssub.s32 %s12, 1
    %s18 = ssub.s32 %s12, 2
    %s25 = sadd.s32 1, %s20
    %p26 = scmp.ge.s32.totalorder %s25, 1
    %s27 = scalar_select %p26, 0, %s25
    %s28 = sadd.s32 1, %s19
    %s29 = scalar_select %p26, %s28, %s19
    %p30 = scmp.ge.s32.totalorder %s29, 2
    %s31 = scalar_select %p30, 0, %s29
    %s32 = ssub.s32 %s19, %s31
    %s33 = ssub.s32 %s20, %s27
    %s34 = sor.u32 %s32, %s33
    %p35 = scmp.eq.s32.totalorder %s34, 0
    %s37 = sadd.s32 %s36, 1
    %s38 = scalar_select %p35, %s36, %s37
    %p41 = pneg %p35
    %p42 = scmp.eq.s32.totalorder %s12, 1
    %p43 = por %p41, %p42
    %p44 = scmp.ne.s32.totalorder %s36, %s39
    %p45 = scmp.eq.s32.totalorder %s12, 0
    %p46 = por %p44, %p45
    %p47 = scmp.ne.s32.totalorder %s36, %s39
    %p48 = scmp.eq.s32.totalorder %s17, 1
    %p49 = por %p47, %p48
    %p50 = scmp.ne.s32.totalorder %s39, %s40
    %p51 = scmp.eq.s32.totalorder %s17, 0
    %p52 = por %p50, %p51
    %p53 = scmp.ne.s32.totalorder %s39, %s40
    %p54 = scmp.eq.s32.totalorder %s18, 1
    %p55 = por %p53, %p54
    %p57 = scmp.ne.s32.totalorder %s40, %s56
    %p58 = scmp.eq.s32.totalorder %s18, 0
    %p59 = por %p57, %p58
    %s60 = ssub.s32 %s19, %s31
    %s61 = ssub.s32 %s20, %s27
    %s62 = sor.u32 %s60, %s61
    %p63 = scmp.eq.s32.totalorder %s62, 0
    %s65 = sadd.s32 %s64, 1
    %s66 = scalar_select %p63, %s64, %s65
    %p69 = pneg %p63
    %p70 = scmp.eq.s32.totalorder %s12, 1
    %p71 = por %p69, %p70
    %p72 = scmp.ne.s32.totalorder %s64, %s67
    %p73 = scmp.eq.s32.totalorder %s12, 0
    %p74 = por %p72, %p73
    %p75 = scmp.ne.s32.totalorder %s64, %s67
    %p76 = scmp.eq.s32.totalorder %s17, 1
    %p77 = por %p75, %p76
    %p78 = scmp.ne.s32.totalorder %s67, %s68
    %p79 = scmp.eq.s32.totalorder %s17, 0
    %p80 = por %p78, %p79
    %p81 = scmp.ne.s32.totalorder %s67, %s68
    %p82 = scmp.eq.s32.totalorder %s18, 1
    %p83 = por %p81, %p82
    %p85 = scmp.ne.s32.totalorder %s68, %s84
    %p86 = scmp.eq.s32.totalorder %s18, 0
    %p87 = por %p85, %p86
    %s89 = sadd.s32 %s88, 1
    %p92 = scmp.eq.s32.totalorder %s12, 1
    %p93 = scmp.ne.s32.totalorder %s88, %s90
    %p94 = scmp.eq.s32.totalorder %s12, 0
    %p95 = por %p93, %p94
    %p96 = scmp.ne.s32.totalorder %s88, %s90
    %p97 = scmp.eq.s32.totalorder %s17, 1
    %p98 = por %p96, %p97
    %p99 = scmp.ne.s32.totalorder %s90, %s91
    %p100 = scmp.eq.s32.totalorder %s17, 0
    %p101 = por %p99, %p100
    %p102 = scmp.ne.s32.totalorder %s90, %s91
    %p103 = scmp.eq.s32.totalorder %s18, 1
    %p104 = por %p102, %p103
    %p106 = scmp.ne.s32.totalorder %s91, %s105
    %p107 = scmp.eq.s32.totalorder %s18, 0
    %p108 = por %p106, %p107
    %s110 = sadd.s32 %s109, 1
    %p113 = scmp.eq.s32.totalorder %s12, 1
    %p114 = scmp.ne.s32.totalorder %s109, %s111
    %p115 = scmp.eq.s32.totalorder %s12, 0
    %p116 = por %p114, %p115
    %p117 = scmp.ne.s32.totalorder %s109, %s111
    %p118 = scmp.eq.s32.totalorder %s17, 1
    %p119 = por %p117, %p118
    %p120 = scmp.ne.s32.totalorder %s111, %s112
    %p121 = scmp.eq.s32.totalorder %s17, 0
    %p122 = por %p120, %p121
    %p123 = scmp.ne.s32.totalorder %s111, %s112
    %p124 = scmp.eq.s32.totalorder %s18, 1
    %p125 = por %p123, %p124
    %p127 = scmp.ne.s32.totalorder %s112, %s126
    %p128 = scmp.eq.s32.totalorder %s18, 0
    %p129 = por %p127, %p128
    %s131 = sadd.s32 %s130, 1
    %p134 = scmp.eq.s32.totalorder %s12, 1
    %p135 = scmp.ne.s32.totalorder %s130, %s132
    %p136 = scmp.eq.s32.totalorder %s12, 0
    %p137 = por %p135, %p136
    %p138 = scmp.ne.s32.totalorder %s130, %s132
    %p139 = scmp.eq.s32.totalorder %s17, 1
    %p140 = por %p138, %p139
    %p141 = scmp.ne.s32.totalorder %s132, %s133
    %p142 = scmp.eq.s32.totalorder %s17, 0
    %p143 = por %p141, %p142
    %p144 = scmp.ne.s32.totalorder %s132, %s133
    %p145 = scmp.eq.s32.totalorder %s18, 1
    %p146 = por %p144, %p145
    %p148 = scmp.ne.s32.totalorder %s133, %s147
    %p149 = scmp.eq.s32.totalorder %s18, 0
    %p150 = por %p148, %p149
    %s152 = sadd.s32 %s151, 1
    %p155 = scmp.eq.s32.totalorder %s12, 1
    %p156 = scmp.ne.s32.totalorder %s151, %s153
    %p157 = scmp.eq.s32.totalorder %s12, 0
    %p158 = por %p156, %p157
    %p159 = scmp.ne.s32.totalorder %s151, %s153
    %p160 = scmp.eq.s32.totalorder %s17, 1
    %p161 = por %p159, %p160
    %p162 = scmp.ne.s32.totalorder %s153, %s154
    %p163 = scmp.eq.s32.totalorder %s17, 0
    %p164 = por %p162, %p163
    %p165 = scmp.ne.s32.totalorder %s153, %s154
    %p166 = scmp.eq.s32.totalorder %s18, 1
    %p167 = por %p165, %p166
    %p169 = scmp.ne.s32.totalorder %s154, %s168
    %p170 = scmp.eq.s32.totalorder %s18, 0
    %p171 = por %p169, %p170
    %s172 = ssub.s32 %s19, %s31
    %s173 = ssub.s32 %s20, %s27
    %s174 = sor.u32 %s172, %s173
    %p175 = scmp.eq.s32.totalorder %s174, 0
    %s177 = sadd.s32 %s176, 1
    %s178 = scalar_select %p175, %s176, %s177
    %p181 = pneg %p175
    %p182 = scmp.eq.s32.totalorder %s12, 1
    %p183 = por %p181, %p182
    %p184 = scmp.ne.s32.totalorder %s176, %s179
    %p185 = scmp.eq.s32.totalorder %s12, 0
    %p186 = por %p184, %p185
    %p187 = scmp.ne.s32.totalorder %s176, %s179
    %p188 = scmp.eq.s32.totalorder %s17, 1
    %p189 = por %p187, %p188
    %p190 = scmp.ne.s32.totalorder %s179, %s180
    %p191 = scmp.eq.s32.totalorder %s17, 0
    %p192 = por %p190, %p191
    %p193 = scmp.ne.s32.totalorder %s179, %s180
    %p194 = scmp.eq.s32.totalorder %s18, 1
    %p195 = por %p193, %p194
    %p197 = scmp.ne.s32.totalorder %s180, %s196
    %p198 = scmp.eq.s32.totalorder %s18, 0
    %p199 = por %p197, %p198
    %p200 = scmp.le.s32.totalorder 1, %s12
    %p201 = scmp.lt.s32.totalorder %s12, 3
    %p202 = pnand %p200, %p201
    %p203 = pneg %p202
    // Predicated region
    $region9: #{decoder_block_pallas.1} parent=5 // pred_check
      _
    $region10: #{decoder_block_pallas.1} parent=5 // pred_check_branch
      %205 = sbr.rel (%p202) target = $region12
    $region11: #{decoder_block_pallas.1} parent=5 // pred_region
      %s206 = ssub.s32 %s12, 1
      // Predicated region
      $region13: #{decoder_block_pallas.1} parent=11 // pred_check
        %p207 = pneg %p101
      $region14: #{decoder_block_pallas.1} parent=11 // pred_check_branch
        %209 = sbr.rel (%p207) target = $region16
      $region15: #{decoder_block_pallas.1} parent=11 // pred_region
        _
      $region16: #{decoder_block_pallas.1} parent=11 // pred_fallthru
        _
      // Predicated region
      $region17: #{decoder_block_pallas.1} parent=11 // pred_check
        %p210 = pneg %p122
      $region18: #{decoder_block_pallas.1} parent=11 // pred_check_branch
        %212 = sbr.rel (%p210) target = $region20
      $region19: #{decoder_block_pallas.1} parent=11 // pred_region
        _
      $region20: #{decoder_block_pallas.1} parent=11 // pred_fallthru
        _
      // Predicated region
      $region21: #{decoder_block_pallas.1} parent=11 // pred_check
        %p213 = pneg %p143
      $region22: #{decoder_block_pallas.1} parent=11 // pred_check_branch
        %215 = sbr.rel (%p213) target = $region24
      $region23: #{decoder_block_pallas.1} parent=11 // pred_region
        _
      $region24: #{decoder_block_pallas.1} parent=11 // pred_fallthru
        _
      // Predicated region
      $region25: #{decoder_block_pallas.1} parent=11 // pred_check
        %p216 = pneg %p164
      $region26: #{decoder_block_pallas.1} parent=11 // pred_check_branch
        %218 = sbr.rel (%p216) target = $region28
      $region27: #{decoder_block_pallas.1} parent=11 // pred_region
        _
      $region28: #{decoder_block_pallas.1} parent=11 // pred_fallthru
        _
    $region12: #{decoder_block_pallas.1} parent=5 // pred_fallthru
      _
    %p219 = scmp.lt.s32.totalorder %s12, 2
    // Predicated region
    $region29: #{decoder_block_pallas.1} parent=5 // pred_check
      %p220 = pneg %p219
    $region30: #{decoder_block_pallas.1} parent=5 // pred_check_branch
      %222 = sbr.rel (%p220) target = $region32
    $region31: #{decoder_block_pallas.1} parent=5 // pred_region
      // Predicated region
      $region33: #{decoder_block_pallas.1} parent=31 // pred_check
        %p223 = pneg %p46
      $region34: #{decoder_block_pallas.1} parent=31 // pred_check_branch
        %225 = sbr.rel (%p223) target = $region36
      $region35: #{decoder_block_pallas.1} parent=31 // pred_region
        %p226 = scmp.lt.s32.totalorder %s19, 1
        %s227 = scalar_select %p226, %s19, 1
        %p228 = scmp.lt.s32.totalorder %s20, 0
        %s229 = scalar_select %p228, %s20, 0
        %s230 = sadd.s32 %s229, %s227
        %s231 = smul.addr %s230, 8
        %s232 = scalar_lea.vmem %s0, %s231
      $region36: #{decoder_block_pallas.1} parent=31 // pred_fallthru
        _
      // Predicated region
      $region37: #{decoder_block_pallas.1} parent=31 // pred_check
        %p233 = pneg %p74
      $region38: #{decoder_block_pallas.1} parent=31 // pred_check_branch
        %235 = sbr.rel (%p233) target = $region40
      $region39: #{decoder_block_pallas.1} parent=31 // pred_region
        %s236 = smul.u32 2, %s20
        %p237 = scmp.lt.s32.totalorder %s19, 1
        %s238 = scalar_select %p237, %s19, 1
        %p239 = scmp.lt.s32.totalorder %s236, 1
        %s240 = scalar_select %p239, %s236, 1
        %s241 = smul.addr %s238, 2
        %s242 = sadd.s32 %s240, %s241
        %s243 = smul.addr %s242, 4
        %s244 = scalar_lea.vmem %s1, %s243
        %s245 = smul.u32 2, %s20
      $region40: #{decoder_block_pallas.1} parent=31 // pred_fallthru
        _
    $region32: #{decoder_block_pallas.1} parent=5 // pred_fallthru
      _
    %p246 = scmp.le.s32.totalorder 1, %s12
    %p247 = scmp.lt.s32.totalorder %s12, 3
    %p248 = pnand %p246, %p247
    %p249 = pneg %p248
    // Predicated region
    $region41: #{decoder_block_pallas.1} parent=5 // pred_check
      _
    $region42: #{decoder_block_pallas.1} parent=5 // pred_check_branch
      %251 = sbr.rel (%p248) target = $region44
    $region43: #{decoder_block_pallas.1} parent=5 // pred_region
      %s252 = ssub.s32 %s12, 1
      %p253 = scmp.lt.s32.totalorder %s21, 1
      %s254 = scalar_select %p253, %s21, 1
      %p255 = scmp.lt.s32.totalorder %s22, 0
      %s256 = scalar_select %p255, %s22, 0
      %s257 = sadd.s32 %s256, %s254
      %s258 = smul.addr %s257, 8
      %s259 = scalar_lea.vmem %s0, %s258
      %p260 = pneg %p52
      %p261 = pneg %p49
      %s262 = smul.u32 2, %s22
      %p263 = scmp.lt.s32.totalorder %s21, 1
      %s264 = scalar_select %p263, %s21, 1
      %p265 = scmp.lt.s32.totalorder %s262, 1
      %s266 = scalar_select %p265, %s262, 1
      %s267 = smul.addr %s264, 2
      %s268 = sadd.s32 %s266, %s267
      %s269 = smul.addr %s268, 4
      %s270 = scalar_lea.vmem %s1, %s269
      %p271 = pneg %p80
      %p272 = pneg %p77
      %p273 = pneg %p101
      %p274 = pneg %p98
      %p275 = pneg %p122
      %p276 = pneg %p119
      %p277 = pneg %p143
      %p278 = pneg %p140
      %p279 = pneg %p164
      %p280 = pneg %p161
      %p281 = pneg %p192
      %p282 = pneg %p189
      %s283 = smul.u32 2, %s22
      %p284 = scmp.lt.s32.totalorder %s21, 1
      %s285 = scalar_select %p284, %s21, 1
      %p286 = scmp.lt.s32.totalorder %s283, 1
      %s287 = scalar_select %p286, %s283, 1
      %s288 = smul.addr %s285, 2
      %s289 = sadd.s32 %s287, %s288
      %s290 = smul.addr %s289, 4
      %s291 = scalar_lea.vmem %s6, %s290
      %p292 = scmp.lt.s32.totalorder %s21, 1
      %s293 = scalar_select %p292, %s21, 1
      %p294 = scmp.lt.s32.totalorder %s22, 0
      %s295 = scalar_select %p294, %s22, 0
      %s296 = sadd.s32 %s295, %s293
      %s297 = smul.addr %s296, 8
      %s298 = scalar_lea.vmem %s0, %s297
      %s299 = smul.u32 2, %s22
      %p300 = scmp.lt.s32.totalorder %s21, 1
      %s301 = scalar_select %p300, %s21, 1
      %p302 = scmp.lt.s32.totalorder %s299, 1
      %s303 = scalar_select %p302, %s299, 1
      %s304 = smul.addr %s301, 2
      %s305 = sadd.s32 %s303, %s304
      %s306 = smul.addr %s305, 4
      %s307 = scalar_lea.vmem %s1, %s306
      %s308 = smul.u32 2, %s22
      %s309 = smul.u32 2, %s22
      %p310 = scmp.lt.s32.totalorder %s21, 1
      %s311 = scalar_select %p310, %s21, 1
      %p312 = scmp.lt.s32.totalorder %s309, 1
      %s313 = scalar_select %p312, %s309, 1
      %s314 = smul.addr %s311, 2
      %s315 = sadd.s32 %s313, %s314
      %s316 = smul.addr %s315, 4
      %s317 = scalar_lea.vmem %s6, %s316
      %s318 = smul.u32 2, %s22
      %v319 = vld [vmem:[%s298] sm:$0xff]
      %v320 = vld [vmem:[%s2] sm:$0xf]
      %vm321 = vcmask 64512
      %v323 = vsel %vm321, %v320, 0
      %325 = vmatprep.subr.mxu0 0.0
      %326 = vmatpush1.msra.mxu0 %v319
      %327 = vmatprep.subr.mxu0 0.0
      %328 = vmatpush1.msra.mxu0 0.0
      %329 = vmatprep.subr.mxu0 0.0
      %330 = vmatpush1.msra.mxu0 0.0
      %331 = vmatprep.subr.mxu0 0.0
      %332 = vmatpush1.msra.mxu0 0.0
      %333 = vmatprep.subr.mxu0 0.0
      %334 = vmatpush1.msra.mxu0 0.0
      %335 = vmatprep.subr.mxu0 0.0
      %336 = vmatpush1.msra.mxu0 0.0
      %337 = vmatprep.subr.mxu0 0.0
      %338 = vmatpush1.msra.mxu0 0.0
      %339 = vmatprep.subr.mxu0 0.0
      %340 = vmatpush1.msra.mxu0 0.0
      %341 = vmatprep.subr.mxu0 0.0
      %342 = vmatpush1.msra.mxu0 0.0
      %343 = vmatprep.subr.mxu0 0.0
      %344 = vmatpush1.msra.mxu0 0.0
      %345 = vmatprep.subr.mxu0 0.0
      %346 = vmatpush1.msra.mxu0 0.0
      %347 = vmatprep.subr.mxu0 0.0
      %348 = vmatpush1.msra.mxu0 0.0
      %349 = vmatprep.subr.mxu0 0.0
      %350 = vmatpush1.msra.mxu0 0.0
      %351 = vmatprep.subr.mxu0 0.0
      %352 = vmatpush1.msra.mxu0 0.0
      %353 = vmatprep.subr.mxu0 0.0
      %354 = vmatpush1.msra.mxu0 0.0
      %355 = vmatprep.subr.mxu0 0.0
      %356 = vmatpush1.msra.mxu0 0.0
      %357 = vmatprep.subr.mxu0 0.0
      %358 = vmatpush1.msra.mxu0 0.0
      %359 = vmatprep.subr.mxu0 0.0
      %360 = vmatpush1.msra.mxu0 0.0
      %361 = vmatprep.subr.mxu0 0.0
      %362 = vmatpush1.msra.mxu0 0.0
      %363 = vmatprep.subr.mxu0 0.0
      %364 = vmatpush1.msra.mxu0 0.0
      %365 = vmatprep.subr.mxu0 0.0
      %366 = vmatpush1.msra.mxu0 0.0
      %367 = vmatprep.subr.mxu0 0.0
      %368 = vmatpush1.msra.mxu0 0.0
      %369 = vmatprep.subr.mxu0 0.0
      %370 = vmatpush1.msra.mxu0 0.0
      %371 = vmatprep.subr.mxu0 0.0
      %372 = vmatpush1.msra.mxu0 0.0
      %373 = vmatprep.subr.mxu0 0.0
      %374 = vmatpush1.msra.mxu0 0.0
      %375 = vmatprep.subr.mxu0 0.0
      %376 = vmatpush1.msra.mxu0 0.0
      %377 = vmatprep.subr.mxu0 0.0
      %378 = vmatpush1.msra.mxu0 0.0
      %379 = vmatprep.subr.mxu0 0.0
      %380 = vmatpush1.msra.mxu0 0.0
      %381 = vmatprep.subr.mxu0 0.0
      %382 = vmatpush1.msra.mxu0 0.0
      %383 = vmatprep.subr.mxu0 0.0
      %384 = vmatpush1.msra.mxu0 0.0
      %385 = vmatprep.subr.mxu0 0.0
      %386 = vmatpush1.msra.mxu0 0.0
      %387 = vmatprep.subr.mxu0 0.0
      %388 = vmatpush1.msra.mxu0 0.0
      %389 = vmatprep.mubr.f32.mxu0 0.0
      %390 = vmatmul.mubr.f32.gmra.mrb[0].mxu0 %v323
      %v391 = vpop.f32.mrb[0].mxu0
      %v392 = vadd.f32 0.0, %v391
      %v393 = vpop.f32.mrb[0].mxu0
      %394 = vdwg.mxu0
      %v395 = vld [vmem:[%s4] sm:$0xff]
      %v396 = vld [vmem:[%s4 + $0x8] sm:$0xff]
      %v397 = vld [vmem:[%s4 + $0x10] sm:$0xff]
      %v398 = vld [vmem:[%s4 + $0x18] sm:$0xff]
      %v399 = vld [vmem:[%s4 + $0x20] sm:$0xff]
      %v400 = vld [vmem:[%s4 + $0x28] sm:$0xff]
      %v401 = vld [vmem:[%s4 + $0x30] sm:$0xff]
      %v402 = vld [vmem:[%s4 + $0x38] sm:$0xff]
      %v403 = vld [vmem:[%s4 + $0x40] sm:$0xff]
      %v404 = vld [vmem:[%s4 + $0x48] sm:$0xff]
      %v405 = vld [vmem:[%s4 + $0x50] sm:$0xff]
      %v406 = vld [vmem:[%s4 + $0x58] sm:$0xff]
      %v407 = vld [vmem:[%s4 + $0x60] sm:$0xff]
      %v408 = vld [vmem:[%s4 + $0x68] sm:$0xff]
      %v409 = vld [vmem:[%s4 + $0x70] sm:$0xff]
      %v410 = vld [vmem:[%s4 + $0x78] sm:$0xff]
      %v411 = vld [vmem:[%s3] sm:$0xf]
      %v412 = vld [vmem:[%s307] sm:$0xff]
      %v414 = vcombine.high %v412, %v412
      %vm415 = vcmask 31744
      %v417 = vsel %vm415, %v411, 0
      %vm419 = vcmask 1043456
      %v420 = vsel %vm419, %v412, 0
      %v422 = vsel %vm419, %v414, 0
      %424 = vmatprep.subr.mxu0 %v422
      %425 = vmatpush1.msra.mxu0 %v420
      %426 = vmatprep.subr.mxu0 0.0
      %427 = vmatpush1.msra.mxu0 0.0
      %428 = vmatprep.subr.mxu0 0.0
      %429 = vmatpush1.msra.mxu0 0.0
      %430 = vmatprep.subr.mxu0 0.0
      %431 = vmatpush1.msra.mxu0 0.0
      %432 = vmatprep.subr.mxu0 0.0
      %433 = vmatpush1.msra.mxu0 0.0
      %434 = vmatprep.subr.mxu0 0.0
      %435 = vmatpush1.msra.mxu0 0.0
      %436 = vmatprep.subr.mxu0 0.0
      %437 = vmatpush1.msra.mxu0 0.0
      %438 = vmatprep.subr.mxu0 0.0
      %439 = vmatpush1.msra.mxu0 0.0
      %440 = vmatprep.subr.mxu0 0.0
      %441 = vmatpush1.msra.mxu0 0.0
      %442 = vmatprep.subr.mxu0 0.0
      %443 = vmatpush1.msra.mxu0 0.0
      %444 = vmatprep.subr.mxu0 0.0
      %445 = vmatpush1.msra.mxu0 0.0
      %446 = vmatprep.subr.mxu0 0.0
      %447 = vmatpush1.msra.mxu0 0.0
      %448 = vmatprep.subr.mxu0 0.0
      %449 = vmatpush1.msra.mxu0 0.0
      %450 = vmatprep.subr.mxu0 0.0
      %451 = vmatpush1.msra.mxu0 0.0
      %452 = vmatprep.subr.mxu0 0.0
      %453 = vmatpush1.msra.mxu0 0.0
      %454 = vmatprep.subr.mxu0 0.0
      %455 = vmatpush1.msra.mxu0 0.0
      %456 = vmatprep.subr.mxu0 0.0
      %457 = vmatpush1.msra.mxu0 0.0
      %458 = vmatprep.subr.mxu0 0.0
      %459 = vmatpush1.msra.mxu0 0.0
      %460 = vmatprep.subr.mxu0 0.0
      %461 = vmatpush1.msra.mxu0 0.0
      %462 = vmatprep.subr.mxu0 0.0
      %463 = vmatpush1.msra.mxu0 0.0
      %464 = vmatprep.subr.mxu0 0.0
      %465 = vmatpush1.msra.mxu0 0.0
      %466 = vmatprep.subr.mxu0 0.0
      %467 = vmatpush1.msra.mxu0 0.0
      %468 = vmatprep.subr.mxu0 0.0
      %469 = vmatpush1.msra.mxu0 0.0
      %470 = vmatprep.subr.mxu0 0.0
      %471 = vmatpush1.msra.mxu0 0.0
      %472 = vmatprep.subr.mxu0 0.0
      %473 = vmatpush1.msra.mxu0 0.0
      %474 = vmatprep.subr.mxu0 0.0
      %475 = vmatpush1.msra.mxu0 0.0
      %476 = vmatprep.subr.mxu0 0.0
      %477 = vmatpush1.msra.mxu0 0.0
      %478 = vmatprep.subr.mxu0 0.0
      %479 = vmatpush1.msra.mxu0 0.0
      %480 = vmatprep.subr.mxu0 0.0
      %481 = vmatpush1.msra.mxu0 0.0
      %482 = vmatprep.subr.mxu0 0.0
      %483 = vmatpush1.msra.mxu0 0.0
      %484 = vmatprep.subr.mxu0 0.0
      %485 = vmatpush1.msra.mxu0 0.0
      %486 = vmatprep.subr.mxu0 0.0
      %487 = vmatpush1.msra.mxu0 0.0
      %488 = vmatprep.mubr.f32.mxu0 0.0
      %489 = vmatmul.mubr.f32.gmra.mrb[0].mxu0 %v417
      %v490 = vpop.f32.mrb[0].mxu0
      %v491 = vadd.f32 0.0, %v490
      %v492 = vpop.f32.mrb[0].mxu0
      %v493 = vadd.f32 0.0, %v492
      %494 = vdwg.mxu0
      %vm495 = vcmask 523264
      %v497 = vsel %vm495, %v392, 0
      %499 = vmatprep.subr.mxu0 %v396
      %500 = vmatpush1.msra.mxu0 %v395
      %501 = vmatprep.subr.mxu0 %v398
      %502 = vmatpush1.msra.mxu0 %v397
      %503 = vmatprep.subr.mxu0 %v400
      %504 = vmatpush1.msra.mxu0 %v399
      %505 = vmatprep.subr.mxu0 %v402
      %506 = vmatpush1.msra.mxu0 %v401
      %507 = vmatprep.subr.mxu0 %v404
      %508 = vmatpush1.msra.mxu0 %v403
      %509 = vmatprep.subr.mxu0 %v406
      %510 = vmatpush1.msra.mxu0 %v405
      %511 = vmatprep.subr.mxu0 %v408
      %512 = vmatpush1.msra.mxu0 %v407
      %513 = vmatprep.subr.mxu0 %v410
      %514 = vmatpush1.msra.mxu0 %v409
      %515 = vmatprep.subr.mxu0 0.0
      %516 = vmatpush1.msra.mxu0 0.0
      %517 = vmatprep.subr.mxu0 0.0
      %518 = vmatpush1.msra.mxu0 0.0
      %519 = vmatprep.subr.mxu0 0.0
      %520 = vmatpush1.msra.mxu0 0.0
      %521 = vmatprep.subr.mxu0 0.0
      %522 = vmatpush1.msra.mxu0 0.0
      %523 = vmatprep.subr.mxu0 0.0
      %524 = vmatpush1.msra.mxu0 0.0
      %525 = vmatprep.subr.mxu0 0.0
      %526 = vmatpush1.msra.mxu0 0.0
      %527 = vmatprep.subr.mxu0 0.0
      %528 = vmatpush1.msra.mxu0 0.0
      %529 = vmatprep.subr.mxu0 0.0
      %530 = vmatpush1.msra.mxu0 0.0
      %531 = vmatprep.subr.mxu0 0.0
      %532 = vmatpush1.msra.mxu0 0.0
      %533 = vmatprep.subr.mxu0 0.0
      %534 = vmatpush1.msra.mxu0 0.0
      %535 = vmatprep.subr.mxu0 0.0
      %536 = vmatpush1.msra.mxu0 0.0
      %537 = vmatprep.subr.mxu0 0.0
      %538 = vmatpush1.msra.mxu0 0.0
      %539 = vmatprep.subr.mxu0 0.0
      %540 = vmatpush1.msra.mxu0 0.0
      %541 = vmatprep.subr.mxu0 0.0
      %542 = vmatpush1.msra.mxu0 0.0
      %543 = vmatprep.subr.mxu0 0.0
      %544 = vmatpush1.msra.mxu0 0.0
      %545 = vmatprep.subr.mxu0 0.0
      %546 = vmatpush1.msra.mxu0 0.0
      %547 = vmatprep.subr.mxu0 0.0
      %548 = vmatpush1.msra.mxu0 0.0
      %549 = vmatprep.subr.mxu0 0.0
      %550 = vmatpush1.msra.mxu0 0.0
      %551 = vmatprep.subr.mxu0 0.0
      %552 = vmatpush1.msra.mxu0 0.0
      %553 = vmatprep.subr.mxu0 0.0
      %554 = vmatpush1.msra.mxu0 0.0
      %555 = vmatprep.subr.mxu0 0.0
      %556 = vmatpush1.msra.mxu0 0.0
      %557 = vmatprep.subr.mxu0 0.0
      %558 = vmatpush1.msra.mxu0 0.0
      %559 = vmatprep.subr.mxu0 0.0
      %560 = vmatpush1.msra.mxu0 0.0
      %561 = vmatprep.subr.mxu0 0.0
      %562 = vmatpush1.msra.mxu0 0.0
      %563 = vmatprep.mubr.f32.mxu0 0.0
      %564 = vmatmul.mubr.f32.gmra.mrb[0].mxu0 %v497
      %v565 = vpop.f32.mrb[0].mxu0
      %v566 = vadd.f32 %v491, %v565
      %v567 = vpop.f32.mrb[0].mxu0
      %v568 = vadd.f32 %v493, %v567
      %569 = vdwg.mxu0
      %v570 = vld [vmem:[%s5] sm:$0xf]
      %572 = vset.pattern.permute.xlu0 0
      %573 = vperm.xlu0 %572, %v570
      %v574 = vpop.permute.xlu0 %573
      %v576 = vadd.f32 %v566, %v574
      %v577 = vadd.f32 %v568, %v574
      %v578 = vmax.f32 %v576, 0.0
      %v579 = vmax.f32 %v577, 0.0
      %v582 = vcombine.low %v578, %v579
      %584 = vst [vmem:[%s317] sm:$0xff] %v582
      %s585 = smul.u32 2, %s22
      %p586 = scmp.lt.s32.totalorder %s21, 1
      %s587 = scalar_select %p586, %s21, 1
      %p588 = scmp.lt.s32.totalorder %s585, 1
      %s589 = scalar_select %p588, %s585, 1
      %s590 = smul.addr %s587, 2
      %s591 = sadd.s32 %s589, %s590
      %s592 = smul.addr %s591, 4
      %s593 = scalar_lea.vmem %s6, %s592
      // Predicated region
      $region45: #{decoder_block_pallas.1} parent=43 // pred_check
        %p594 = pneg %p189
      $region46: #{decoder_block_pallas.1} parent=43 // pred_check_branch
        %596 = sbr.rel (%p594) target = $region48
      $region47: #{decoder_block_pallas.1} parent=43 // pred_region
        %s597 = smul.u32 2, %s22
      $region48: #{decoder_block_pallas.1} parent=43 // pred_fallthru
        _
    $region44: #{decoder_block_pallas.1} parent=5 // pred_fallthru
      _
    %p598 = scmp.le.s32.totalorder 2, %s12
    // Predicated region
    $region49: #{decoder_block_pallas.1} parent=5 // pred_check
      %p599 = pneg %p598
    $region50: #{decoder_block_pallas.1} parent=5 // pred_check_branch
      %601 = sbr.rel (%p599) target = $region52
    $region51: #{decoder_block_pallas.1} parent=5 // pred_region
      %s602 = ssub.s32 %s12, 2
      // Predicated region
      $region53: #{decoder_block_pallas.1} parent=51 // pred_check
        %p603 = pneg %p195
      $region54: #{decoder_block_pallas.1} parent=51 // pred_check_branch
        %605 = sbr.rel (%p603) target = $region56
      $region55: #{decoder_block_pallas.1} parent=51 // pred_region
        %s606 = smul.u32 2, %s24
        %p607 = scmp.lt.s32.totalorder %s23, 1
        %s608 = scalar_select %p607, %s23, 1
        %p609 = scmp.lt.s32.totalorder %s606, 1
        %s610 = scalar_select %p609, %s606, 1
        %s611 = smul.addr %s608, 2
        %s612 = sadd.s32 %s610, %s611
        %s613 = smul.addr %s612, 4
        %s614 = scalar_lea.vmem %s6, %s613
      $region56: #{decoder_block_pallas.1} parent=51 // pred_fallthru
        _
    $region52: #{decoder_block_pallas.1} parent=5 // pred_fallthru
      _
  $region6: #{decoder_block_pallas.1} parent=0 // loop_footer
    %s16 = sadd.s32 1, %s12
  $region7: #{decoder_block_pallas.1} parent=0 // loop_footer_branch
    %11 = sbr.rel target = $region3
  $region8: #{decoder_block_pallas.1} parent=0 // loop_exit
    _

</llo_original>
